<compile_context>
chip_gen: v7x
topology: tpu7x:2x2x1
jax: 0.10.0
libtpu: 0.0.40
codegen_flags: <defaults>
</compile_context>

<pallas_src>
import functools

import jax
import jax.numpy as jnp
from jax.experimental import pallas as pl
from jax.experimental.pallas import tpu as pltpu


def _round_up(x, m):
    return (x + m - 1) // m * m


def _vmem_budget_bytes():
    """~80% of this generation's VMEM (headroom for Mosaic internal scratch)."""
    cap = 64 << 20                       # conservative fallback (v7x per-core)
    try:
        info = pltpu.get_tpu_info()
        cap = int(getattr(info, "vmem_capacity_bytes", cap) or cap)
    except Exception:
        pass
    return int(0.8 * cap)


def prepare_column_parallel_weight(weight):
    """One-time transform: torch (out_features, in_features) -> (K_pad, N).

    Gives the kernel a lane-dense RHS (no in-kernel transpose) with the
    reduction dim zero-padded to a multiple of 128, so the forward never pays
    a per-call weight transpose / pad (full N*K HBM read+write).
    """
    n, k = weight.shape
    k_pad = k if k <= 128 else _round_up(k, 128)
    w_t = weight.T
    if k_pad != k:
        w_t = jnp.pad(w_t, ((0, k_pad - k), (0, 0)))
    return w_t


def _select_tiles(M, N, K_pad, in_it, out_it, has_bias, vmem_budget, tm, tn, tk):
    # --- K tile: multiple of 128 dividing K_pad (capped at 512) -------------
    if tk is None:
        if K_pad % 128 != 0:             # K < 128: single full-K block
            tk = K_pad
        else:
            tk = 128
            t = (min(K_pad, 512) // 128) * 128
            while t >= 128:
                if K_pad % t == 0:
                    tk = t
                    break
                t -= 128
    # --- M/N tiles: generation aware -----------------------------------------
    # 1024 for bf16 on the 128 MiB-VMEM generations (v5e/v6e), else 512.
    base = 1024 if (in_it <= 2 and vmem_budget >= (96 << 20)) else 512
    if tm is None:
        tm = M if M <= base else base
    if tn is None:
        tn = N if N <= base else base
    # Megacore: make sure mid-size problems give both TensorCores work.
    if pl.cdiv(M, tm) * pl.cdiv(N, tn) < 2:
        if N >= 256:
            tn = _round_up(pl.cdiv(N, 2), 128)
        elif M >= 512:
            tm = _round_up(pl.cdiv(M, 2), 8)

    def need(tm_, tn_, x_res_):
        return (2 * tm_ * (K_pad if x_res_ else tk) * in_it     # X (dbl buf)
                + 2 * tk * tn_ * in_it                          # W^T (dbl buf)
                + ((2 * tn_ * 4) if has_bias else 0)            # bias
                + 2 * tm_ * tn_ * out_it                        # output
                + tm_ * tn_ * 4)                                # f32 accumulator

    while need(tm, tn, False) > vmem_budget and (tm > 256 or tn > 256):
        if tn >= tm and tn > 256:
            tn = max(256, _round_up(tn // 2, 128))
        else:
            tm = max(256, _round_up(tm // 2, 8))

    # Keep the X row-panel resident across the (j, k) axes when it fits: X is
    # then read from HBM once per M-block instead of once per (M, N)-block.
    x_resident = (K_pad // tk > 1 and tk % 128 == 0
                  and need(tm, tn, True) <= vmem_budget)
    return tm, tn, tk, x_resident, need(tm, tn, x_resident)


def _make_kernel(tk, x_resident, has_bias, precision):
    def kernel(x_ref, wt_ref, *refs):
        # x_ref:  (tm, tk) or (tm, K_pad) if resident
        # wt_ref: (tk, tn)    [b_ref: (1, tn) f32]
        # o_ref:  (tm, tn)    acc_ref: (tm, tn) f32 scratch across K steps
        if has_bias:
            b_ref, o_ref, acc_ref = refs
        else:
            o_ref, acc_ref = refs
        k = pl.program_id(2)

        @pl.when(k == 0)
        def _():
            acc_ref[...] = jnp.zeros_like(acc_ref)

        if x_resident:
            x_tile = x_ref[:, pl.ds(pl.multiple_of(k * tk, 128), tk)]
        else:
            x_tile = x_ref[...]
        # Steady state: pure MXU accumulate (no bias, no transpose, no cast).
        acc_ref[...] += jnp.dot(x_tile, wt_ref[...],
                                preferred_element_type=jnp.float32,
                                precision=precision)

        @pl.when(k == pl.num_programs(2) - 1)
        def _():
            # Epilogue: optional bias add, single cast, lane-dense store.
            res = acc_ref[...]
            if has_bias:
                res = res + b_ref[...]
            o_ref[...] = res.astype(o_ref.dtype)

    return kernel


@functools.partial(jax.jit, static_argnames=("tm", "tn", "tk", "precision"))
def _column_parallel_linear_prepared(x, w_t, bias=None, *, tm=None, tn=None,
                                     tk=None, precision=None):
    """Y = X @ W.T + b with the weight already prepared as w_t: (K_pad, N)."""
    orig_shape = x.shape
    K = orig_shape[-1]
    K_pad, N = w_t.shape
    assert K_pad >= K, (K_pad, K)
    x2d = x.reshape(-1, K)
    if K_pad != K:
        # Only the (small) activation gets padded per call; the weight is
        # already padded once at preparation time.
        x2d = jnp.pad(x2d, ((0, 0), (0, K_pad - K)))
    M = x2d.shape[0]

    has_bias = bias is not None
    out_dtype = x.dtype
    in_it = x2d.dtype.itemsize
    out_it = jnp.dtype(out_dtype).itemsize

    vmem_budget = _vmem_budget_bytes()
    tm, tn, tk, x_resident, vmem_need = _select_tiles(
        M, N, K_pad, in_it, out_it, has_bias, vmem_budget, tm, tn, tk)
    assert K_pad % tk == 0, (K_pad, tk)

    grid = (pl.cdiv(M, tm), pl.cdiv(N, tn), K_pad // tk)

    if x_resident:
        x_spec = pl.BlockSpec((tm, K_pad), lambda i, j, k: (i, 0))
    else:
        x_spec = pl.BlockSpec((tm, tk), lambda i, j, k: (i, k))
    in_specs = [x_spec, pl.BlockSpec((tk, tn), lambda i, j, k: (k, j))]
    operands = [x2d, w_t]
    if has_bias:
        in_specs.append(pl.BlockSpec((1, tn), lambda i, j, k: (0, j)))
        operands.append(bias.reshape(1, N).astype(jnp.float32))

    x_reads = M * K_pad * (1 if x_resident else grid[1])
    w_reads = K_pad * N * grid[0]
    cost = pl.CostEstimate(
        flops=2 * M * N * K_pad,
        transcendentals=0,
        bytes_accessed=int(in_it * (x_reads + w_reads) + out_it * M * N),
    )

    vmem_limit = int(min(vmem_budget, max(32 << 20, vmem_need + (8 << 20))))

    out2d = pl.pallas_call(
        _make_kernel(tk, x_resident, has_bias, precision),
        out_shape=jax.ShapeDtypeStruct((M, N), out_dtype),
        grid_spec=pltpu.PrefetchScalarGridSpec(
            num_scalar_prefetch=0,
            grid=grid,
            in_specs=in_specs,
            out_specs=pl.BlockSpec((tm, tn), lambda i, j, k: (i, j)),
            scratch_shapes=[pltpu.VMEM((tm, tn), jnp.float32)],
        ),
        compiler_params=pltpu.CompilerParams(
            dimension_semantics=("parallel", "parallel", "arbitrary"),
            vmem_limit_bytes=vmem_limit,
        ),
        cost_estimate=cost,
    )(*operands)

    return out2d.reshape(*orig_shape[:-1], N)


def column_parallel_linear(x, weight, bias=None, *, weight_is_prepared=False,
                           tm=None, tn=None, tk=None, precision=None):
    """Forward of ColumnParallelLinear (mp_world_size == 1, use_ft=False,
    gather_output=False): Y = X @ W.T + b.

    weight: (out_features, in_features) torch layout, or an already-prepared
    (K_pad, out_features) array if weight_is_prepared=True.
    """
    if not weight_is_prepared:
        # TODO(synk): in a real layer, prepare the weight once at init (see
        # ColumnParallelLinearTPU) so this transpose+pad is not paid per call.
        weight = prepare_column_parallel_weight(weight)
    return _column_parallel_linear_prepared(x, weight, bias, tm=tm, tn=tn,
                                            tk=tk, precision=precision)


class ColumnParallelLinearTPU:
    """Single-device ColumnParallelLinear: stores the weight once in the
    prepared (K_pad, N) lane-dense layout, so the forward pays no per-call
    transpose / pad of the weight. copy_to_model_parallel_region is the
    identity in forward; use_ft=False (no gelu/dropout), gather_output=False.
    """

    def __init__(self, weight, bias=None):
        self.out_features, self.in_features = weight.shape
        self.w_t = prepare_column_parallel_weight(weight)   # prepared ONCE
        self.bias = bias

    def __call__(self, x, **kwargs):
        return _column_parallel_linear_prepared(x, self.w_t, self.bias, **kwargs)


if __name__ == "__main__":
    # Module config (mirrors ColumnParallelLinear.__init__ with
    # model_parallel_world_size == 1, use_ft=False, gather_output=False):
    in_features = 32
    out_features = 64
    initializer_range = 0.02
    batch, seq = 2, 8

    key = jax.random.PRNGKey(0)
    k_x, k_w, k_x2, k_w2, k_x3, k_w3 = jax.random.split(key, 6)

    # weight ~ Normal(0, initializer_range) shape (out, in); bias = zeros.
    weight = (initializer_range *
              jax.random.normal(k_w, (out_features, in_features), dtype=jnp.float32))
    bias = jnp.zeros((out_features,), dtype=jnp.float32)
    x = jax.random.normal(k_x, (batch, seq, in_features), dtype=jnp.float32)

    layer = ColumnParallelLinearTPU(weight, bias)        # weight prepared once
    y = jax.block_until_ready(layer(x))
    y_ref = x @ weight.T + bias
    assert y.shape == (batch, seq, out_features), y.shape
    assert jnp.allclose(y, y_ref, atol=1e-5, rtol=1e-5), float(jnp.abs(y - y_ref).max())

    # Second check: exercises K tiling with K_pad=640 / tk=128 (5 K steps, no
    # padding waste), the resident X row-panel path with in-kernel pl.ds K
    # slicing, a partial N output tile and the accumulator epilogue with bias.
    M2, K2, N2 = 384, 640, 384
    x2 = jax.random.normal(k_x2, (M2, K2), dtype=jnp.float32)
    w2 = initializer_range * jax.random.normal(k_w2, (N2, K2), dtype=jnp.float32)
    b2 = 0.01 * jnp.arange(N2, dtype=jnp.float32)
    layer2 = ColumnParallelLinearTPU(w2, b2)
    y2 = jax.block_until_ready(layer2(x2))
    y2_ref = jnp.dot(x2, w2.T, precision=jax.lax.Precision.HIGHEST) + b2
    assert y2.shape == (M2, N2), y2.shape
    assert jnp.allclose(y2, y2_ref, atol=1e-3, rtol=1e-3), float(jnp.abs(y2 - y2_ref).max())

    # Third check: bias=None variant (no bias operand, no epilogue add).
    M3, K3, N3 = 8, 32, 128
    x3 = jax.random.normal(k_x3, (M3, K3), dtype=jnp.float32)
    w3 = initializer_range * jax.random.normal(k_w3, (N3, K3), dtype=jnp.float32)
    y3 = jax.block_until_ready(column_parallel_linear(x3, w3, None))
    y3_ref = x3 @ w3.T
    assert y3.shape == (M3, N3), y3.shape
    assert jnp.allclose(y3, y3_ref, atol=1e-4, rtol=1e-4), float(jnp.abs(y3 - y3_ref).max())

    print("KERNEL_OK")
</pallas_src>

<mosaic_0001>
module attributes {stable_mosaic.version = 11 : i64} {
  func.func @kernel(%arg0: i32, %arg1: i32, %arg2: i32, %arg3: memref<16x32xf32, #tpu.memory_space<vmem>>, %arg4: memref<32x64xf32, #tpu.memory_space<vmem>>, %arg5: memref<1x64xf32, #tpu.memory_space<vmem>>, %arg6: memref<16x64xf32, #tpu.memory_space<vmem>>, %arg7: memref<16x64xf32, #tpu.memory_space<vmem>>) attributes {dimension_semantics = [#tpu.dimension_semantics<parallel>, #tpu.dimension_semantics<parallel>, #tpu.dimension_semantics<arbitrary>], iteration_bounds = array<i64: 1, 1, 1>, scalar_prefetch = 0 : i64, scratch_operands = 1 : i64, tpu.core_type = #tpu.core_type<tc>, window_params = [{transform_indices = @transform_0, window_bounds = array<i64: 16, 32>}, {transform_indices = @transform_1, window_bounds = array<i64: 32, 64>}, {transform_indices = @transform_2, window_bounds = array<i64: 1, 64>}, {transform_indices = @transform_3, window_bounds = array<i64: 16, 64>}]} {
    %c0_i32 = arith.constant 0 : i32
    %0 = arith.cmpi eq, %arg2, %c0_i32 : i32
    %1 = arith.extui %0 : i1 to i32
    %c0_i32_0 = arith.constant 0 : i32
    %2 = arith.cmpi ne, %1, %c0_i32_0 : i32
    scf.if %2 {
      %cst_10 = arith.constant 0.000000e+00 : f32
      %12 = vector.broadcast %cst_10 : f32 to vector<16x64xf32>
      %c0_11 = arith.constant 0 : index
      %c0_12 = arith.constant 0 : index
      %13 = vector.load %arg7[%c0_11, %c0_12] : memref<16x64xf32, #tpu.memory_space<vmem>>, vector<16x64xf32>
      tpu.vector_store %arg7[%c0_11, %c0_12], %12 {strides = array<i32>} : memref<16x64xf32, #tpu.memory_space<vmem>>, vector<16x64xf32>,
    } else {
    }
    %c0 = arith.constant 0 : index
    %c0_1 = arith.constant 0 : index
    %3 = vector.load %arg3[%c0, %c0_1] : memref<16x32xf32, #tpu.memory_space<vmem>>, vector<16x32xf32>
    %c0_2 = arith.constant 0 : index
    %c0_3 = arith.constant 0 : index
    %4 = vector.load %arg7[%c0_2, %c0_3] : memref<16x64xf32, #tpu.memory_space<vmem>>, vector<16x64xf32>
    %c0_4 = arith.constant 0 : index
    %c0_5 = arith.constant 0 : index
    %5 = vector.load %arg4[%c0_4, %c0_5] : memref<32x64xf32, #tpu.memory_space<vmem>>, vector<32x64xf32>
    %cst = arith.constant dense<0.000000e+00> : vector<16x64xf32>
    %6 = tpu.matmul %3, %5, %cst {dimension_numbers = #tpu.dot_dimension_numbers<[1], [0], [0], [1], [0, 0, 1, 1], [], []>} : vector<16x32xf32>, vector<32x64xf32>, vector<16x64xf32> -> vector<16x64xf32>
    %7 = arith.addf %4, %6 : vector<16x64xf32>
    %c0_6 = arith.constant 0 : index
    %c0_7 = arith.constant 0 : index
    %8 = vector.load %arg7[%c0_6, %c0_7] : memref<16x64xf32, #tpu.memory_space<vmem>>, vector<16x64xf32>
    tpu.vector_store %arg7[%c0_6, %c0_7], %7 {strides = array<i32>} : memref<16x64xf32, #tpu.memory_space<vmem>>, vector<16x64xf32>,
    %c0_i32_8 = arith.constant 0 : i32
    %9 = arith.cmpi eq, %arg2, %c0_i32_8 : i32
    %10 = arith.extui %9 : i1 to i32
    %c0_i32_9 = arith.constant 0 : i32
    %11 = arith.cmpi ne, %10, %c0_i32_9 : i32
    scf.if %11 {
      %c0_10 = arith.constant 0 : index
      %c0_11 = arith.constant 0 : index
      %12 = vector.load %arg7[%c0_10, %c0_11] : memref<16x64xf32, #tpu.memory_space<vmem>>, vector<16x64xf32>
      %c0_12 = arith.constant 0 : index
      %c0_13 = arith.constant 0 : index
      %13 = vector.load %arg5[%c0_12, %c0_13] : memref<1x64xf32, #tpu.memory_space<vmem>>, vector<1x64xf32>
      %14 = vector.broadcast %13 : vector<1x64xf32> to vector<16x64xf32>
      %15 = arith.addf %12, %14 : vector<16x64xf32>
      %c0_14 = arith.constant 0 : index
      %c0_15 = arith.constant 0 : index
      %16 = vector.load %arg6[%c0_14, %c0_15] : memref<16x64xf32, #tpu.memory_space<vmem>>, vector<16x64xf32>
      tpu.vector_store %arg6[%c0_14, %c0_15], %15 {strides = array<i32>} : memref<16x64xf32, #tpu.memory_space<vmem>>, vector<16x64xf32>,
    } else {
    }
    return
  }
  func.func @transform_0(%arg0: i32, %arg1: i32, %arg2: i32) -> (i32, i32) {
    %c0_i32 = arith.constant 0 : i32
    return %arg0, %arg2 : i32, i32
  }
  func.func @transform_1(%arg0: i32, %arg1: i32, %arg2: i32) -> (i32, i32) {
    %c0_i32 = arith.constant 0 : i32
    return %arg2, %arg1 : i32, i32
  }
  func.func @transform_2(%arg0: i32, %arg1: i32, %arg2: i32) -> (i32, i32) {
    %c0_i32 = arith.constant 0 : i32
    %c0_i32_0 = arith.constant 0 : i32
    return %c0_i32, %arg1 : i32, i32
  }
  func.func @transform_3(%arg0: i32, %arg1: i32, %arg2: i32) -> (i32, i32) {
    %c0_i32 = arith.constant 0 : i32
    return %arg0, %arg1 : i32, i32
  }
}

</mosaic_0001>

<llo_original>
// kernel: _column_parallel_linear_prepared.1
$region0: #{_column_parallel_linear_prepared.1}
  #allocation0 [shape = 'u32[]', space=smem, size = 0x4, offset = 0x4, fixed_abs, tag = 'smem constant byte address 0x4 - core index']
  #allocation1 [shape = 'u32[144,128]{1,0:T(1,128)}', space=vmem, size = 0x12000, scoped, tag = 'internal scratch']
  #allocation2 [shape = 'f32[16,64]{1,0:T(8,128)}', space=vmem, size = 0x2000, scoped, tag = 'scratch operand']
  %s0 = inlined_call_operand.hbm [shape: f32[16,32], index: 0, kind: input, shape index: {}]
  %s1 = inlined_call_operand.hbm [shape: f32[32,64], index: 1, kind: input, shape index: {}]
  %s2 = inlined_call_operand.vmem [shape: f32[1,64], index: 2, kind: input, shape index: {}]
  %s3 = inlined_call_operand.hbm [shape: f32[16,64], index: 3, kind: output, shape index: {}]
  %s4 = sld [smem:[#allocation0]]
  $region38: #{_column_parallel_linear_prepared.1} parent=0
    _
  %s6 = ssub.s32 1, %s4
  %s7 = scalar_select 0, %s6, %s4
  $region1: #{_column_parallel_linear_prepared.1} parent=0
    #allocation3 [shape = 'u8[8192]{0}', space=vmem, size = 0x2000, scoped, tag = 'input window, operand 0, single buffered']
    #allocation4 [shape = 's32[1]{0}', space=sflag, size = 0x4, scoped, tag = 'scoped memory for _column_parallel_linear_prepared.1']
    #allocation5 [shape = 's32[1]{0}', space=sflag, size = 0x4, scoped, tag = 'scoped memory for _column_parallel_linear_prepared.1']
    #allocation6 [shape = 'u8[16384]{0}', space=vmem, size = 0x4000, scoped, tag = 'input window, operand 1, single buffered']
    #allocation7 [shape = 's32[1]{0}', space=sflag, size = 0x4, scoped, tag = 'scoped memory for _column_parallel_linear_prepared.1']
    #allocation8 [shape = 'u8[8192]{0}', space=vmem, size = 0x2000, scoped, tag = 'output window, operand 0, single buffered']
    %8 = vsyncpa [#allocation4], 0
    %9 = vsyncpa [#allocation7], 0
    %10 = vsyncpa [#allocation5], 0
    // Predicated region
    $region2: #{_column_parallel_linear_prepared.1} parent=1 // pred_check
      _
    $region3: #{_column_parallel_linear_prepared.1} parent=1 // pred_check_branch
      %12 = sbr.rel (0) target = $region5
    $region4: #{_column_parallel_linear_prepared.1} parent=1 // pred_region
      %s14 = ssub.s32 256, 256
      %15 = vsyncadd [#allocation4], %s14
      %s16 = sshll.u32 [#allocation3], 4
      %s17 = int_to_ptr.vmem [resolvable:$true] %s16
      %22 = dma.hbm_to_vmem [thread:$0]  %s0, 256, %s17, [#allocation4], 128, 128, 8
    $region5: #{_column_parallel_linear_prepared.1} parent=1 // pred_fallthru
      _
    // Predicated region
    $region6: #{_column_parallel_linear_prepared.1} parent=1 // pred_check
      _
    $region7: #{_column_parallel_linear_prepared.1} parent=1 // pred_check_branch
      %24 = sbr.rel (0) target = $region9
    $region8: #{_column_parallel_linear_prepared.1} parent=1 // pred_region
      %s26 = ssub.s32 512, 512
      %27 = vsyncadd [#allocation7], %s26
      %s28 = sshll.u32 [#allocation6], 4
      %s29 = int_to_ptr.vmem [resolvable:$true] %s28
      %34 = dma.hbm_to_vmem [thread:$0]  %s1, 512, %s29, [#allocation7], 128, 128, 8
    $region9: #{_column_parallel_linear_prepared.1} parent=1 // pred_fallthru
      _
    // Predicated region
    $region10: #{_column_parallel_linear_prepared.1} parent=1 // pred_check
      _
    $region11: #{_column_parallel_linear_prepared.1} parent=1 // pred_check_branch
      %36 = sbr.rel (0) target = $region13
    $region12: #{_column_parallel_linear_prepared.1} parent=1 // pred_region
      _
    $region13: #{_column_parallel_linear_prepared.1} parent=1 // pred_fallthru
      _
    // Predicated region
    $region14: #{_column_parallel_linear_prepared.1} parent=1 // pred_check
      _
    $region15: #{_column_parallel_linear_prepared.1} parent=1 // pred_check_branch
      %38 = sbr.rel (0) target = $region17
    $region16: #{_column_parallel_linear_prepared.1} parent=1 // pred_region
      %39 = dma.done [#allocation4], 256
    $region17: #{_column_parallel_linear_prepared.1} parent=1 // pred_fallthru
      _
    // Predicated region
    $region18: #{_column_parallel_linear_prepared.1} parent=1 // pred_check
      _
    $region19: #{_column_parallel_linear_prepared.1} parent=1 // pred_check_branch
      %41 = sbr.rel (0) target = $region21
    $region20: #{_column_parallel_linear_prepared.1} parent=1 // pred_region
      %42 = dma.done [#allocation7], 512
    $region21: #{_column_parallel_linear_prepared.1} parent=1 // pred_fallthru
      _
    %p43 = scmp.eq.s32.totalorder 0, 0
    // Predicated region
    $region22: #{_column_parallel_linear_prepared.1} parent=1 // pred_check
      %p44 = pneg %p43
    $region23: #{_column_parallel_linear_prepared.1} parent=1 // pred_check_branch
      %46 = sbr.rel (%p44) target = $region25
    $region24: #{_column_parallel_linear_prepared.1} parent=1 // pred_region
      %vm47 = vcmask 523264
      %48 = vst.msk [vmem:[#allocation2] sm:$0xff] %vm47, 0.0
      %49 = vst.msk [vmem:[#allocation2 + $0x8] sm:$0xff] %vm47, 0.0
    $region25: #{_column_parallel_linear_prepared.1} parent=1 // pred_fallthru
      _
    %v50 = vld [vmem:[#allocation3] sm:$0xff]
    %v51 = vld [vmem:[#allocation3 + $0x8] sm:$0xff]
    %v52 = vld [vmem:[#allocation2] sm:$0xff]
    %v53 = vld [vmem:[#allocation2 + $0x8] sm:$0xff]
    %v54 = vld [vmem:[#allocation6] sm:$0xff]
    %v55 = vld [vmem:[#allocation6 + $0x8] sm:$0xff]
    %v56 = vld [vmem:[#allocation6 + $0x10] sm:$0xff]
    %v57 = vld [vmem:[#allocation6 + $0x18] sm:$0xff]
    %vm58 = vcmask 261120
    %v60 = vsel %vm58, %v50, 0
    %v63 = vsel %vm58, %v51, 0
    %65 = vmatprep.subr.mxu0 0.0
    %66 = vmatpush1.msra.mxu0 %v54
    %67 = vmatprep.subr.mxu0 0.0
    %68 = vmatpush1.msra.mxu0 %v55
    %69 = vmatprep.subr.mxu0 0.0
    %70 = vmatpush1.msra.mxu0 %v56
    %71 = vmatprep.subr.mxu0 0.0
    %72 = vmatpush1.msra.mxu0 %v57
    %73 = vmatprep.subr.mxu0 0.0
    %74 = vmatpush1.msra.mxu0 0.0
    %75 = vmatprep.subr.mxu0 0.0
    %76 = vmatpush1.msra.mxu0 0.0
    %77 = vmatprep.subr.mxu0 0.0
    %78 = vmatpush1.msra.mxu0 0.0
    %79 = vmatprep.subr.mxu0 0.0
    %80 = vmatpush1.msra.mxu0 0.0
    %81 = vmatprep.subr.mxu0 0.0
    %82 = vmatpush1.msra.mxu0 0.0
    %83 = vmatprep.subr.mxu0 0.0
    %84 = vmatpush1.msra.mxu0 0.0
    %85 = vmatprep.subr.mxu0 0.0
    %86 = vmatpush1.msra.mxu0 0.0
    %87 = vmatprep.subr.mxu0 0.0
    %88 = vmatpush1.msra.mxu0 0.0
    %89 = vmatprep.subr.mxu0 0.0
    %90 = vmatpush1.msra.mxu0 0.0
    %91 = vmatprep.subr.mxu0 0.0
    %92 = vmatpush1.msra.mxu0 0.0
    %93 = vmatprep.subr.mxu0 0.0
    %94 = vmatpush1.msra.mxu0 0.0
    %95 = vmatprep.subr.mxu0 0.0
    %96 = vmatpush1.msra.mxu0 0.0
    %97 = vmatprep.subr.mxu0 0.0
    %98 = vmatpush1.msra.mxu0 0.0
    %99 = vmatprep.subr.mxu0 0.0
    %100 = vmatpush1.msra.mxu0 0.0
    %101 = vmatprep.subr.mxu0 0.0
    %102 = vmatpush1.msra.mxu0 0.0
    %103 = vmatprep.subr.mxu0 0.0
    %104 = vmatpush1.msra.mxu0 0.0
    %105 = vmatprep.subr.mxu0 0.0
    %106 = vmatpush1.msra.mxu0 0.0
    %107 = vmatprep.subr.mxu0 0.0
    %108 = vmatpush1.msra.mxu0 0.0
    %109 = vmatprep.subr.mxu0 0.0
    %110 = vmatpush1.msra.mxu0 0.0
    %111 = vmatprep.subr.mxu0 0.0
    %112 = vmatpush1.msra.mxu0 0.0
    %113 = vmatprep.subr.mxu0 0.0
    %114 = vmatpush1.msra.mxu0 0.0
    %115 = vmatprep.subr.mxu0 0.0
    %116 = vmatpush1.msra.mxu0 0.0
    %117 = vmatprep.subr.mxu0 0.0
    %118 = vmatpush1.msra.mxu0 0.0
    %119 = vmatprep.subr.mxu0 0.0
    %120 = vmatpush1.msra.mxu0 0.0
    %121 = vmatprep.subr.mxu0 0.0
    %122 = vmatpush1.msra.mxu0 0.0
    %123 = vmatprep.subr.mxu0 0.0
    %124 = vmatpush1.msra.mxu0 0.0
    %125 = vmatprep.subr.mxu0 0.0
    %126 = vmatpush1.msra.mxu0 0.0
    %127 = vmatprep.subr.mxu0 0.0
    %128 = vmatpush1.msra.mxu0 0.0
    %129 = vmatprep.mubr.f32.mxu0 0.0
    %130 = vmatmul.mubr.f32.gmra.mrb[0].mxu0 %v60
    %v131 = vpop.f32.mrb[0].mxu0
    %v132 = vadd.f32 0.0, %v131
    %v133 = vpop.f32.mrb[0].mxu0
    %134 = vmatprep.mubr.f32.mxu0 0.0
    %135 = vmatmul.mubr.f32.gmra.mrb[0].mxu0 %v63
    %v136 = vpop.f32.mrb[0].mxu0
    %v137 = vadd.f32 0.0, %v136
    %v138 = vpop.f32.mrb[0].mxu0
    %139 = vdwg.mxu0
    %v140 = vadd.f32 %v52, %v132
    %v141 = vadd.f32 %v53, %v137
    %vm142 = vcmask 523264
    %143 = vst.msk [vmem:[#allocation2] sm:$0xff] %vm142, %v140
    %144 = vst.msk [vmem:[#allocation2 + $0x8] sm:$0xff] %vm142, %v141
    // Predicated region
    $region26: #{_column_parallel_linear_prepared.1} parent=1 // pred_check
      %p145 = pneg %p43
    $region27: #{_column_parallel_linear_prepared.1} parent=1 // pred_check_branch
      %147 = sbr.rel (%p145) target = $region29
    $region28: #{_column_parallel_linear_prepared.1} parent=1 // pred_region
      %v148 = vld [vmem:[#allocation2] sm:$0xff]
      %v149 = vld [vmem:[#allocation2 + $0x8] sm:$0xff]
      %v150 = vld [vmem:[%s2] sm:$0x1]
      %v152 = vlaneseq
      %v153 = vshrl.u32 %v152, 7
      %v154 = vsub.s32 0, %v153
      %v155 = vrot.slane %v150, %v154
      %v157 = vadd.f32 %v148, %v155
      %v158 = vadd.f32 %v149, %v155
      %159 = vst.msk [vmem:[#allocation8] sm:$0xff] %vm142, %v157
      %160 = vst.msk [vmem:[#allocation8 + $0x8] sm:$0xff] %vm142, %v158
    $region29: #{_column_parallel_linear_prepared.1} parent=1 // pred_fallthru
      _
    // Predicated region
    $region30: #{_column_parallel_linear_prepared.1} parent=1 // pred_check
      _
    $region31: #{_column_parallel_linear_prepared.1} parent=1 // pred_check_branch
      %162 = sbr.rel (0) target = $region33
    $region32: #{_column_parallel_linear_prepared.1} parent=1 // pred_region
      %s164 = ssub.s32 256, 256
      %165 = vsyncadd [#allocation5], %s164
      %s166 = sshll.u32 [#allocation8], 4
      %s167 = int_to_ptr.vmem [resolvable:$true] %s166
      %172 = dma.vmem_to_hbm [thread:$0]  %s167, 256, %s3, [#allocation5], 128, 128, 8
    $region33: #{_column_parallel_linear_prepared.1} parent=1 // pred_fallthru
      _
    // Predicated region
    $region34: #{_column_parallel_linear_prepared.1} parent=1 // pred_check
      _
    $region35: #{_column_parallel_linear_prepared.1} parent=1 // pred_check_branch
      %174 = sbr.rel (0) target = $region37
    $region36: #{_column_parallel_linear_prepared.1} parent=1 // pred_region
      %175 = dma.done [#allocation5], 256
    $region37: #{_column_parallel_linear_prepared.1} parent=1 // pred_fallthru
      _
    %176 = vsyncpa [#allocation4], 1
    %177 = vsyncpa [#allocation7], 1
    %178 = vsyncpa [#allocation5], 1

</llo_original>
